<compile_context>
chip_gen: v7x
topology: tpu7x:2x2x1
jax: 0.10.0
libtpu: 0.0.40
codegen_flags: <defaults>
</compile_context>

<pallas_src>
import functools

import jax
import jax.numpy as jnp
from jax.experimental import pallas as pl
from jax.experimental.pallas import tpu as pltpu

LN_EPS = 1e-5


def _round_up(n, m):
    return ((n + m - 1) // m) * m


def _cdiv(a, b):
    return -(-a // b)


def _vmem_capacity_bytes():
    """Chip VMEM capacity; conservative (v7x per-TC) fallback if query fails."""
    try:
        return int(pltpu.get_tpu_info().vmem_capacity_bytes)
    except Exception:
        return 64 << 20


def _layernorm_f32(z, gamma, beta, d_in, d_in_pad):
    """LayerNorm over the last axis. Padded lanes of z must be exactly zero
    (guaranteed by the wrapper's zero-padding of x, W2 columns and b2)."""
    inv_n = 1.0 / d_in
    mean = jnp.sum(z, axis=-1, keepdims=True) * inv_n
    diff = z - mean
    if d_in != d_in_pad:
        mask = (jax.lax.broadcasted_iota(jnp.int32, z.shape, 1) < d_in
                ).astype(jnp.float32)
        diff = diff * mask
    var = jnp.sum(diff * diff, axis=-1, keepdims=True) * inv_n
    zhat = (z - mean) * jax.lax.rsqrt(var + LN_EPS)
    return zhat * gamma + beta


def _ffn_kernel_fused(x_ref, w1_ref, b1_ref, w2_ref, b2_ref, gamma_ref, beta_ref,
                      o_ref, *, d_in, d_in_pad, compute_dtype):
    """Single grid step per row tile: weights fully VMEM-resident, no accumulator."""
    x_mx = x_ref[...].astype(compute_dtype)
    h = jnp.dot(x_mx, w1_ref[...], preferred_element_type=jnp.float32)
    h = jnp.maximum(h + b1_ref[...].astype(jnp.float32), 0.0)
    y = jnp.dot(h.astype(compute_dtype), w2_ref[...],
                preferred_element_type=jnp.float32)
    z = y + b2_ref[...].astype(jnp.float32) + x_ref[...].astype(jnp.float32)
    out = _layernorm_f32(z, gamma_ref[...].astype(jnp.float32),
                         beta_ref[...].astype(jnp.float32), d_in, d_in_pad)
    o_ref[...] = out.astype(o_ref.dtype)


def _ffn_kernel_tiled(x_ref, w1_ref, b1_ref, w2_ref, b2_ref, gamma_ref, beta_ref,
                      o_ref, acc_ref, xcast_ref, *, d_in, d_in_pad, compute_dtype):
    """d_hid reduction tiled over the last grid axis; f32 accumulator in VMEM."""
    k = pl.program_id(1)

    @pl.when(k == 0)
    def _():
        acc_ref[...] = jnp.zeros_like(acc_ref)
        # Hoist the x -> bf16 cast: do it once per row tile, reuse for every k.
        xcast_ref[...] = x_ref[...].astype(compute_dtype)

    h = jnp.dot(xcast_ref[...], w1_ref[...], preferred_element_type=jnp.float32)
    h = jnp.maximum(h + b1_ref[...].astype(jnp.float32), 0.0)
    acc_ref[...] += jnp.dot(h.astype(compute_dtype), w2_ref[...],
                            preferred_element_type=jnp.float32)

    # Epilogue on the last d_hid tile: bias2 + residual + LayerNorm.
    @pl.when(k == pl.num_programs(1) - 1)
    def _():
        z = (acc_ref[...] + b2_ref[...].astype(jnp.float32)
             + x_ref[...].astype(jnp.float32))
        out = _layernorm_f32(z, gamma_ref[...].astype(jnp.float32),
                             beta_ref[...].astype(jnp.float32), d_in, d_in_pad)
        o_ref[...] = out.astype(o_ref.dtype)


def positionwise_feed_forward(x, w1, b1, w2, b2, gamma, beta, *,
                              tm=None, compute_dtype=jnp.bfloat16,
                              io_dtype=None, max_weight_vmem_bytes=None,
                              force_hid_tile=None):
    """x: (B, L, d_in). w1: (d_in, d_hid), w2: (d_hid, d_in). Returns (B, L, d_in).

    io_dtype: optionally cast activations (x in / out) to this dtype (e.g. bf16)
    to halve streaming traffic; residual + LayerNorm math stays in f32.
    """
    B, L, d_in = x.shape
    d_hid = w1.shape[1]
    rows = B * L

    d_in_pad = _round_up(d_in, 128)
    d_hid_pad = _round_up(d_hid, 128)

    w_bytes = jnp.dtype(compute_dtype).itemsize
    vmem_cap = _vmem_capacity_bytes()

    # --- d_hid tiling: keep the weights VMEM-resident whenever they fit. ---
    if max_weight_vmem_bytes is None:
        max_weight_vmem_bytes = int(vmem_cap * 0.30)
    full_weight_bytes = 2 * d_in_pad * d_hid_pad * w_bytes

    if force_hid_tile is not None:
        tk = min(max(128, (int(force_hid_tile) // 128) * 128), d_hid_pad)
    elif full_weight_bytes <= max_weight_vmem_bytes:
        tk = d_hid_pad                        # fully resident -> single k step
    else:
        # Cap so (W1 + W2) x double-buffer stays under ~30% of VMEM.
        budget = int(vmem_cap * 0.30)
        tk = max(128, (budget // (4 * d_in_pad * w_bytes)) // 128 * 128)
        tk = min(tk, d_hid_pad)

    d_hid_pad2 = _round_up(d_hid_pad, tk)
    num_k = d_hid_pad2 // tk

    # --- Row tiling (>=2 tiles when possible so v7x's 2 TensorCores both work). ---
    tm_target = tm if tm is not None else (256 if num_k == 1 else 512)
    tm_eff = max(16, min(int(tm_target), _round_up(rows, 16)))
    tm_eff = _round_up(tm_eff, 16)            # multiple of 16 (bf16 tile minimum)
    if rows >= 32 and _cdiv(rows, tm_eff) < 2:
        tm_eff = _round_up(_cdiv(rows, 2), 16)
    rows_pad = _round_up(rows, tm_eff)
    n_row_tiles = rows_pad // tm_eff

    # --- Pad & cast operands (zero padding keeps padded z lanes exactly 0). ---
    io_dt = jnp.dtype(io_dtype) if io_dtype is not None else jnp.dtype(x.dtype)
    x2d = x.reshape(rows, d_in).astype(io_dt)
    x2d = jnp.pad(x2d, ((0, rows_pad - rows), (0, d_in_pad - d_in)))
    w1p = jnp.pad(w1, ((0, d_in_pad - d_in), (0, d_hid_pad2 - d_hid))).astype(compute_dtype)
    w2p = jnp.pad(w2, ((0, d_hid_pad2 - d_hid), (0, d_in_pad - d_in))).astype(compute_dtype)
    b1p = jnp.pad(b1, (0, d_hid_pad2 - d_hid)).reshape(1, d_hid_pad2).astype(jnp.float32)
    b2p = jnp.pad(b2, (0, d_in_pad - d_in)).reshape(1, d_in_pad).astype(jnp.float32)
    g2d = jnp.pad(gamma, (0, d_in_pad - d_in)).reshape(1, d_in_pad).astype(jnp.float32)
    be2d = jnp.pad(beta, (0, d_in_pad - d_in)).reshape(1, d_in_pad).astype(jnp.float32)

    io_bytes = io_dt.itemsize

    # --- VMEM budget (double-buffered I/O tiles + weights + h + scratch). ---
    vmem_est = (2 * tm_eff * d_in_pad * io_bytes       # x tiles
                + 2 * tm_eff * d_in_pad * io_bytes     # out tiles
                + 2 * 2 * d_in_pad * tk * w_bytes      # W1 + W2 tiles
                + 2 * (tk + 3 * d_in_pad) * 4          # biases / gamma / beta
                + tm_eff * tk * (4 + w_bytes)          # h (f32) + bf16 copy
                + tm_eff * d_in_pad * 4)               # z / LN temporaries
    if num_k > 1:
        vmem_est += tm_eff * d_in_pad * (4 + w_bytes)  # acc (f32) + xcast scratch
    vmem_limit = int(min(max(int(vmem_est * 1.25) + (4 << 20), 32 << 20),
                         int(vmem_cap * 0.9)))

    # --- Cost estimate: weight HBM traffic re-streams per row tile iff k > 1. ---
    weight_hbm = 2 * d_in_pad * d_hid_pad2 * w_bytes * (1 if num_k == 1 else n_row_tiles)
    cost = pl.CostEstimate(
        flops=4 * rows * d_in * d_hid,
        transcendentals=rows,
        bytes_accessed=(2 * rows_pad * d_in_pad * io_bytes
                        + weight_hbm
                        + (d_hid_pad2 + 3 * d_in_pad) * 4),
    )

    if num_k == 1:
        kernel = functools.partial(_ffn_kernel_fused, d_in=d_in, d_in_pad=d_in_pad,
                                   compute_dtype=compute_dtype)
        grid_spec = pltpu.PrefetchScalarGridSpec(
            num_scalar_prefetch=0,
            grid=(n_row_tiles,),
            in_specs=[
                pl.BlockSpec((tm_eff, d_in_pad), lambda i: (i, 0)),       # x tile
                pl.BlockSpec((d_in_pad, d_hid_pad2), lambda i: (0, 0)),   # W1 (resident)
                pl.BlockSpec((1, d_hid_pad2), lambda i: (0, 0)),          # b1
                pl.BlockSpec((d_hid_pad2, d_in_pad), lambda i: (0, 0)),   # W2 (resident)
                pl.BlockSpec((1, d_in_pad), lambda i: (0, 0)),            # b2
                pl.BlockSpec((1, d_in_pad), lambda i: (0, 0)),            # gamma
                pl.BlockSpec((1, d_in_pad), lambda i: (0, 0)),            # beta
            ],
            out_specs=pl.BlockSpec((tm_eff, d_in_pad), lambda i: (i, 0)),
            scratch_shapes=[],
        )
        dim_sem = ("parallel",)
    else:
        kernel = functools.partial(_ffn_kernel_tiled, d_in=d_in, d_in_pad=d_in_pad,
                                   compute_dtype=compute_dtype)
        grid_spec = pltpu.PrefetchScalarGridSpec(
            num_scalar_prefetch=0,
            grid=(n_row_tiles, num_k),
            in_specs=[
                pl.BlockSpec((tm_eff, d_in_pad), lambda i, k: (i, 0)),    # x tile
                pl.BlockSpec((d_in_pad, tk), lambda i, k: (0, k)),        # W1 column tile
                pl.BlockSpec((1, tk), lambda i, k: (0, k)),               # b1 tile
                pl.BlockSpec((tk, d_in_pad), lambda i, k: (k, 0)),        # W2 row tile
                pl.BlockSpec((1, d_in_pad), lambda i, k: (0, 0)),         # b2
                pl.BlockSpec((1, d_in_pad), lambda i, k: (0, 0)),         # gamma
                pl.BlockSpec((1, d_in_pad), lambda i, k: (0, 0)),         # beta
            ],
            out_specs=pl.BlockSpec((tm_eff, d_in_pad), lambda i, k: (i, 0)),
            scratch_shapes=[pltpu.VMEM((tm_eff, d_in_pad), jnp.float32),
                            pltpu.VMEM((tm_eff, d_in_pad), compute_dtype)],
        )
        dim_sem = ("parallel", "arbitrary")

    out2d = pl.pallas_call(
        kernel,
        out_shape=jax.ShapeDtypeStruct((rows_pad, d_in_pad), io_dt),
        grid_spec=grid_spec,
        compiler_params=pltpu.CompilerParams(
            dimension_semantics=dim_sem,
            vmem_limit_bytes=vmem_limit,
        ),
        cost_estimate=cost,
    )(x2d, w1p, b1p, w2p, b2p, g2d, be2d)

    return out2d[:rows, :d_in].reshape(B, L, d_in)


def init_params(key, d_in, d_hid, dtype=jnp.float32):
    # Mirrors the PyTorch module's parameter shapes:
    #   w_1.weight: (d_hid, d_in, 1) -> stored transposed as (d_in, d_hid)
    #   w_2.weight: (d_in, d_hid, 1) -> stored transposed as (d_hid, d_in)
    k1, k2, k3, k4 = jax.random.split(key, 4)
    s1 = 1.0 / jnp.sqrt(d_in)
    s2 = 1.0 / jnp.sqrt(d_hid)
    w1 = jax.random.uniform(k1, (d_in, d_hid), dtype, -s1, s1)
    b1 = jax.random.uniform(k2, (d_hid,), dtype, -s1, s1)
    w2 = jax.random.uniform(k3, (d_hid, d_in), dtype, -s2, s2)
    b2 = jax.random.uniform(k4, (d_in,), dtype, -s2, s2)
    gamma = jnp.ones((d_in,), dtype)
    beta = jnp.zeros((d_in,), dtype)
    return w1, b1, w2, b2, gamma, beta


def _reference(x, w1, b1, w2, b2, gamma, beta, compute_dtype=jnp.bfloat16):
    # Mirrors the kernel's numerics: bf16 matmuls with f32 accumulation,
    # f32 residual + LayerNorm.
    xc = x.astype(compute_dtype)
    h = jnp.dot(xc, w1.astype(compute_dtype), preferred_element_type=jnp.float32)
    h = jnp.maximum(h + b1.astype(jnp.float32), 0.0)
    y = jnp.dot(h.astype(compute_dtype), w2.astype(compute_dtype),
                preferred_element_type=jnp.float32) + b2.astype(jnp.float32)
    z = y + x.astype(jnp.float32)
    mean = jnp.mean(z, axis=-1, keepdims=True)
    var = jnp.mean((z - mean) ** 2, axis=-1, keepdims=True)
    zhat = (z - mean) * jax.lax.rsqrt(var + LN_EPS)
    return (zhat * gamma + beta).astype(x.dtype)


if __name__ == "__main__":
    key = jax.random.PRNGKey(0)
    kx, kp, kp2 = jax.random.split(key, 3)

    # Config 1: tiny FFN -> weights VMEM-resident, fused single-k kernel path.
    B, L, d_in, d_hid = 2, 8, 32, 64
    x = jax.random.normal(kx, (B, L, d_in), jnp.float32)
    params = init_params(kp, d_in, d_hid)
    out = jax.block_until_ready(positionwise_feed_forward(x, *params))
    ref = _reference(x, *params)
    assert out.shape == (B, L, d_in)
    assert jnp.allclose(out, ref, atol=2e-3, rtol=2e-3), "mismatch (fused path)"

    # Config 2: force the tiled d_hid-reduction (k > 1) accumulator path.
    d_hid2 = 256
    params2 = init_params(kp2, d_in, d_hid2)
    out2 = jax.block_until_ready(
        positionwise_feed_forward(x, *params2, force_hid_tile=128))
    ref2 = _reference(x, *params2)
    assert out2.shape == (B, L, d_in)
    assert jnp.allclose(out2, ref2, atol=2e-3, rtol=2e-3), "mismatch (tiled path)"

    print("KERNEL_OK")
</pallas_src>

<mosaic_0001>
module attributes {stable_mosaic.version = 11 : i64} {
  func.func @_ffn_kernel_fused(%arg0: i32, %arg1: memref<16x128xf32, #tpu.memory_space<vmem>>, %arg2: memref<128x128xbf16, #tpu.memory_space<vmem>>, %arg3: memref<1x128xf32, #tpu.memory_space<vmem>>, %arg4: memref<128x128xbf16, #tpu.memory_space<vmem>>, %arg5: memref<1x128xf32, #tpu.memory_space<vmem>>, %arg6: memref<1x128xf32, #tpu.memory_space<vmem>>, %arg7: memref<1x128xf32, #tpu.memory_space<vmem>>, %arg8: memref<16x128xf32, #tpu.memory_space<vmem>>) attributes {dimension_semantics = [#tpu.dimension_semantics<parallel>], iteration_bounds = array<i64: 1>, scalar_prefetch = 0 : i64, scratch_operands = 0 : i64, tpu.core_type = #tpu.core_type<tc>, window_params = [{transform_indices = @transform_0, window_bounds = array<i64: 16, 128>}, {pipeline_mode = #tpu.pipeline_mode<synchronous>, transform_indices = @transform_1, window_bounds = array<i64: 128, 128>}, {pipeline_mode = #tpu.pipeline_mode<synchronous>, transform_indices = @transform_2, window_bounds = array<i64: 1, 128>}, {pipeline_mode = #tpu.pipeline_mode<synchronous>, transform_indices = @transform_3, window_bounds = array<i64: 128, 128>}, {pipeline_mode = #tpu.pipeline_mode<synchronous>, transform_indices = @transform_4, window_bounds = array<i64: 1, 128>}, {pipeline_mode = #tpu.pipeline_mode<synchronous>, transform_indices = @transform_5, window_bounds = array<i64: 1, 128>}, {pipeline_mode = #tpu.pipeline_mode<synchronous>, transform_indices = @transform_6, window_bounds = array<i64: 1, 128>}, {transform_indices = @transform_7, window_bounds = array<i64: 16, 128>}]} {
    %c0 = arith.constant 0 : index
    %c0_0 = arith.constant 0 : index
    %0 = vector.load %arg1[%c0, %c0_0] : memref<16x128xf32, #tpu.memory_space<vmem>>, vector<16x128xf32>
    %1 = arith.truncf %0 : vector<16x128xf32> to vector<16x128xbf16>
    %c0_1 = arith.constant 0 : index
    %c0_2 = arith.constant 0 : index
    %2 = vector.load %arg2[%c0_1, %c0_2] : memref<128x128xbf16, #tpu.memory_space<vmem>>, vector<128x128xbf16>
    %cst = arith.constant dense<0.000000e+00> : vector<16x128xf32>
    %3 = tpu.matmul %1, %2, %cst {dimension_numbers = #tpu.dot_dimension_numbers<[1], [0], [0], [1], [0, 0, 1, 1], [], []>} : vector<16x128xbf16>, vector<128x128xbf16>, vector<16x128xf32> -> vector<16x128xf32>
    %c0_3 = arith.constant 0 : index
    %c0_4 = arith.constant 0 : index
    %4 = vector.load %arg3[%c0_3, %c0_4] : memref<1x128xf32, #tpu.memory_space<vmem>>, vector<1x128xf32>
    %5 = vector.broadcast %4 : vector<1x128xf32> to vector<16x128xf32>
    %6 = arith.addf %3, %5 : vector<16x128xf32>
    %cst_5 = arith.constant 0.000000e+00 : f32
    %7 = vector.broadcast %cst_5 : f32 to vector<16x128xf32>
    %8 = arith.maximumf %6, %7 : vector<16x128xf32>
    %9 = arith.truncf %8 : vector<16x128xf32> to vector<16x128xbf16>
    %c0_6 = arith.constant 0 : index
    %c0_7 = arith.constant 0 : index
    %10 = vector.load %arg4[%c0_6, %c0_7] : memref<128x128xbf16, #tpu.memory_space<vmem>>, vector<128x128xbf16>
    %cst_8 = arith.constant dense<0.000000e+00> : vector<16x128xf32>
    %11 = tpu.matmul %9, %10, %cst_8 {dimension_numbers = #tpu.dot_dimension_numbers<[1], [0], [0], [1], [0, 0, 1, 1], [], []>} : vector<16x128xbf16>, vector<128x128xbf16>, vector<16x128xf32> -> vector<16x128xf32>
    %c0_9 = arith.constant 0 : index
    %c0_10 = arith.constant 0 : index
    %12 = vector.load %arg5[%c0_9, %c0_10] : memref<1x128xf32, #tpu.memory_space<vmem>>, vector<1x128xf32>
    %13 = vector.broadcast %12 : vector<1x128xf32> to vector<16x128xf32>
    %14 = arith.addf %11, %13 : vector<16x128xf32>
    %c0_11 = arith.constant 0 : index
    %c0_12 = arith.constant 0 : index
    %15 = vector.load %arg1[%c0_11, %c0_12] : memref<16x128xf32, #tpu.memory_space<vmem>>, vector<16x128xf32>
    %16 = arith.addf %14, %15 : vector<16x128xf32>
    %c0_13 = arith.constant 0 : index
    %c0_14 = arith.constant 0 : index
    %17 = vector.load %arg6[%c0_13, %c0_14] : memref<1x128xf32, #tpu.memory_space<vmem>>, vector<1x128xf32>
    %c0_15 = arith.constant 0 : index
    %c0_16 = arith.constant 0 : index
    %18 = vector.load %arg7[%c0_15, %c0_16] : memref<1x128xf32, #tpu.memory_space<vmem>>, vector<1x128xf32>
    %cst_17 = arith.constant dense<0.000000e+00> : vector<16xf32>
    %19 = vector.multi_reduction <add>, %16, %cst_17 [1] : vector<16x128xf32> to vector<16xf32>
    %20 = vector.shape_cast %19 : vector<16xf32> to vector<16x1xf32>
    %cst_18 = arith.constant 3.125000e-02 : f32
    %21 = vector.broadcast %cst_18 : f32 to vector<16x1xf32>
    %22 = arith.mulf %20, %21 : vector<16x1xf32>
    %23 = vector.broadcast %22 : vector<16x1xf32> to vector<16x128xf32>
    %24 = arith.subf %16, %23 : vector<16x128xf32>
    %25 = tpu.iota {dimensions = array<i32: 1>} : vector<16x128xi32>
    %c32_i32 = arith.constant 32 : i32
    %26 = vector.broadcast %c32_i32 : i32 to vector<16x128xi32>
    %27 = arith.cmpi slt, %25, %26 : vector<16x128xi32>
    %28 = arith.extui %27 : vector<16x128xi1> to vector<16x128xi32>
    %29 = arith.sitofp %28 : vector<16x128xi32> to vector<16x128xf32>
    %30 = arith.mulf %24, %29 : vector<16x128xf32>
    %31 = arith.mulf %30, %30 : vector<16x128xf32>
    %cst_19 = arith.constant dense<0.000000e+00> : vector<16xf32>
    %32 = vector.multi_reduction <add>, %31, %cst_19 [1] : vector<16x128xf32> to vector<16xf32>
    %33 = vector.shape_cast %32 : vector<16xf32> to vector<16x1xf32>
    %cst_20 = arith.constant 3.125000e-02 : f32
    %34 = vector.broadcast %cst_20 : f32 to vector<16x1xf32>
    %35 = arith.mulf %33, %34 : vector<16x1xf32>
    %36 = vector.broadcast %22 : vector<16x1xf32> to vector<16x128xf32>
    %37 = arith.subf %16, %36 : vector<16x128xf32>
    %cst_21 = arith.constant 9.99999974E-6 : f32
    %38 = vector.broadcast %cst_21 : f32 to vector<16x1xf32>
    %39 = arith.addf %35, %38 : vector<16x1xf32>
    %40 = math.rsqrt %39 : vector<16x1xf32>
    %41 = vector.broadcast %40 : vector<16x1xf32> to vector<16x128xf32>
    %42 = arith.mulf %37, %41 : vector<16x128xf32>
    %43 = vector.broadcast %17 : vector<1x128xf32> to vector<16x128xf32>
    %44 = arith.mulf %42, %43 : vector<16x128xf32>
    %45 = vector.broadcast %18 : vector<1x128xf32> to vector<16x128xf32>
    %46 = arith.addf %44, %45 : vector<16x128xf32>
    %c0_22 = arith.constant 0 : index
    %c0_23 = arith.constant 0 : index
    %47 = vector.load %arg8[%c0_22, %c0_23] : memref<16x128xf32, #tpu.memory_space<vmem>>, vector<16x128xf32>
    tpu.vector_store %arg8[%c0_22, %c0_23], %46 {strides = array<i32>} : memref<16x128xf32, #tpu.memory_space<vmem>>, vector<16x128xf32>,
    return
  }
  func.func @transform_0(%arg0: i32) -> (i32, i32) {
    %c0_i32 = arith.constant 0 : i32
    %c0_i32_0 = arith.constant 0 : i32
    return %arg0, %c0_i32 : i32, i32
  }
  func.func @transform_1(%arg0: i32) -> (i32, i32) {
    %c0_i32 = arith.constant 0 : i32
    %c0_i32_0 = arith.constant 0 : i32
    %c0_i32_1 = arith.constant 0 : i32
    return %c0_i32, %c0_i32_0 : i32, i32
  }
  func.func @transform_2(%arg0: i32) -> (i32, i32) {
    %c0_i32 = arith.constant 0 : i32
    %c0_i32_0 = arith.constant 0 : i32
    %c0_i32_1 = arith.constant 0 : i32
    return %c0_i32, %c0_i32_0 : i32, i32
  }
  func.func @transform_3(%arg0: i32) -> (i32, i32) {
    %c0_i32 = arith.constant 0 : i32
    %c0_i32_0 = arith.constant 0 : i32
    %c0_i32_1 = arith.constant 0 : i32
    return %c0_i32, %c0_i32_0 : i32, i32
  }
  func.func @transform_4(%arg0: i32) -> (i32, i32) {
    %c0_i32 = arith.constant 0 : i32
    %c0_i32_0 = arith.constant 0 : i32
    %c0_i32_1 = arith.constant 0 : i32
    return %c0_i32, %c0_i32_0 : i32, i32
  }
  func.func @transform_5(%arg0: i32) -> (i32, i32) {
    %c0_i32 = arith.constant 0 : i32
    %c0_i32_0 = arith.constant 0 : i32
    %c0_i32_1 = arith.constant 0 : i32
    return %c0_i32, %c0_i32_0 : i32, i32
  }
  func.func @transform_6(%arg0: i32) -> (i32, i32) {
    %c0_i32 = arith.constant 0 : i32
    %c0_i32_0 = arith.constant 0 : i32
    %c0_i32_1 = arith.constant 0 : i32
    return %c0_i32, %c0_i32_0 : i32, i32
  }
  func.func @transform_7(%arg0: i32) -> (i32, i32) {
    %c0_i32 = arith.constant 0 : i32
    %c0_i32_0 = arith.constant 0 : i32
    return %arg0, %c0_i32 : i32, i32
  }
}

</mosaic_0001>

<llo_original>
// kernel: tpu_custom_call.1
$region0: #{tpu_custom_call.1}
  #allocation0 [shape = 'u32[]', space=smem, size = 0x4, offset = 0x4, fixed_abs, tag = 'smem constant byte address 0x4 - core index']
  #allocation1 [shape = 'u32[144,128]{1,0:T(1,128)}', space=vmem, size = 0x12000, scoped, tag = 'internal scratch']
  %s0 = inlined_call_operand.hbm [shape: f32[16,128], index: 0, kind: input, shape index: {}]
  %s1 = inlined_call_operand.hbm [shape: bf16[128,128], index: 1, kind: input, shape index: {}]
  %s2 = inlined_call_operand.vmem [shape: f32[1,128], index: 2, kind: input, shape index: {}]
  %s3 = inlined_call_operand.hbm [shape: bf16[128,128], index: 3, kind: input, shape index: {}]
  %s4 = inlined_call_operand.vmem [shape: f32[1,128], index: 4, kind: input, shape index: {}]
  %s5 = inlined_call_operand.vmem [shape: f32[1,128], index: 5, kind: input, shape index: {}]
  %s6 = inlined_call_operand.vmem [shape: f32[1,128], index: 6, kind: input, shape index: {}]
  %s7 = inlined_call_operand.hbm [shape: f32[16,128], index: 7, kind: output, shape index: {}]
  %s8 = sld [smem:[#allocation0]]
  $region50: #{tpu_custom_call.1} parent=0
    _
  %s10 = ssub.s32 1, %s8
  %s11 = scalar_select 0, %s10, %s8
  $region1: #{tpu_custom_call.1} parent=0
    #allocation2 [shape = 'u8[8192]{0}', space=vmem, size = 0x2000, scoped, tag = 'input window, operand 0, single buffered']
    #allocation3 [shape = 's32[1]{0}', space=sflag, size = 0x4, scoped, tag = 'scoped memory for tpu_custom_call.1']
    #allocation4 [shape = 's32[1]{0}', space=sflag, size = 0x4, scoped, tag = 'scoped memory for tpu_custom_call.1']
    #allocation5 [shape = 'u8[32768]{0}', space=vmem, size = 0x8000, scoped, tag = 'input window, operand 1, single buffered']
    #allocation6 [shape = 's32[1]{0}', space=sflag, size = 0x4, scoped, tag = 'scoped memory for tpu_custom_call.1']
    #allocation7 [shape = 'u8[32768]{0}', space=vmem, size = 0x8000, scoped, tag = 'input window, operand 3, single buffered']
    #allocation8 [shape = 'u8[8192]{0}', space=vmem, size = 0x2000, scoped, tag = 'output window, operand 0, single buffered']
    %12 = vsyncpa [#allocation3], 0
    %13 = vsyncpa [#allocation6], 0
    %14 = vsyncpa [#allocation4], 0
    // Predicated region
    $region2: #{tpu_custom_call.1} parent=1 // pred_check
      _
    $region3: #{tpu_custom_call.1} parent=1 // pred_check_branch
      %16 = sbr.rel (0) target = $region5
    $region4: #{tpu_custom_call.1} parent=1 // pred_region
      %s18 = ssub.s32 256, 256
      %19 = vsyncadd [#allocation3], %s18
      %s20 = sshll.u32 [#allocation2], 4
      %s21 = int_to_ptr.vmem [resolvable:$true] %s20
      %26 = dma.hbm_to_vmem [thread:$0]  %s0, 256, %s21, [#allocation3], 128, 128, 8
    $region5: #{tpu_custom_call.1} parent=1 // pred_fallthru
      _
    // Predicated region
    $region6: #{tpu_custom_call.1} parent=1 // pred_check
      _
    $region7: #{tpu_custom_call.1} parent=1 // pred_check_branch
      %28 = sbr.rel (0) target = $region9
    $region8: #{tpu_custom_call.1} parent=1 // pred_region
      %s30 = ssub.s32 1024, 1024
      %31 = vsyncadd [#allocation6], %s30
      %s32 = sshll.u32 [#allocation5], 4
      %s33 = int_to_ptr.vmem [resolvable:$true] %s32
      %38 = dma.hbm_to_vmem [thread:$0]  %s1, 1024, %s33, [#allocation6], 64, 64, 4
    $region9: #{tpu_custom_call.1} parent=1 // pred_fallthru
      _
    // Predicated region
    $region10: #{tpu_custom_call.1} parent=1 // pred_check
      _
    $region11: #{tpu_custom_call.1} parent=1 // pred_check_branch
      %40 = sbr.rel (0) target = $region13
    $region12: #{tpu_custom_call.1} parent=1 // pred_region
      _
    $region13: #{tpu_custom_call.1} parent=1 // pred_fallthru
      _
    // Predicated region
    $region14: #{tpu_custom_call.1} parent=1 // pred_check
      _
    $region15: #{tpu_custom_call.1} parent=1 // pred_check_branch
      %42 = sbr.rel (0) target = $region17
    $region16: #{tpu_custom_call.1} parent=1 // pred_region
      %s44 = ssub.s32 1024, 1024
      %45 = vsyncadd [#allocation6], %s44
      %s46 = sshll.u32 [#allocation7], 4
      %s47 = int_to_ptr.vmem [resolvable:$true] %s46
      %52 = dma.hbm_to_vmem [thread:$0]  %s3, 1024, %s47, [#allocation6], 64, 64, 4
    $region17: #{tpu_custom_call.1} parent=1 // pred_fallthru
      _
    // Predicated region
    $region18: #{tpu_custom_call.1} parent=1 // pred_check
      _
    $region19: #{tpu_custom_call.1} parent=1 // pred_check_branch
      %54 = sbr.rel (0) target = $region21
    $region20: #{tpu_custom_call.1} parent=1 // pred_region
      _
    $region21: #{tpu_custom_call.1} parent=1 // pred_fallthru
      _
    // Predicated region
    $region22: #{tpu_custom_call.1} parent=1 // pred_check
      _
    $region23: #{tpu_custom_call.1} parent=1 // pred_check_branch
      %56 = sbr.rel (0) target = $region25
    $region24: #{tpu_custom_call.1} parent=1 // pred_region
      _
    $region25: #{tpu_custom_call.1} parent=1 // pred_fallthru
      _
    // Predicated region
    $region26: #{tpu_custom_call.1} parent=1 // pred_check
      _
    $region27: #{tpu_custom_call.1} parent=1 // pred_check_branch
      %58 = sbr.rel (0) target = $region29
    $region28: #{tpu_custom_call.1} parent=1 // pred_region
      _
    $region29: #{tpu_custom_call.1} parent=1 // pred_fallthru
      _
    // Predicated region
    $region30: #{tpu_custom_call.1} parent=1 // pred_check
      _
    $region31: #{tpu_custom_call.1} parent=1 // pred_check_branch
      %60 = sbr.rel (0) target = $region33
    $region32: #{tpu_custom_call.1} parent=1 // pred_region
      %61 = dma.done [#allocation3], 256
    $region33: #{tpu_custom_call.1} parent=1 // pred_fallthru
      _
    // Predicated region
    $region34: #{tpu_custom_call.1} parent=1 // pred_check
      _
    $region35: #{tpu_custom_call.1} parent=1 // pred_check_branch
      %63 = sbr.rel (0) target = $region37
    $region36: #{tpu_custom_call.1} parent=1 // pred_region
      %64 = dma.done [#allocation6], 1024
    $region37: #{tpu_custom_call.1} parent=1 // pred_fallthru
      _
    // Predicated region
    $region38: #{tpu_custom_call.1} parent=1 // pred_check
      _
    $region39: #{tpu_custom_call.1} parent=1 // pred_check_branch
      %66 = sbr.rel (0) target = $region41
    $region40: #{tpu_custom_call.1} parent=1 // pred_region
      %67 = dma.done [#allocation6], 1024
    $region41: #{tpu_custom_call.1} parent=1 // pred_fallthru
      _
    %v69 = vld [vmem:[#allocation2] sm:$0xff]
    %v70 = vld [vmem:[#allocation2 + $0x8] sm:$0xff]
    %v71 = vpack.c.bf16 %v70, %v69
    %v72 = vld [vmem:[#allocation5] sm:$0xf]
    %v73 = vld [vmem:[#allocation5 + $0x4] sm:$0xf]
    %v74 = vld [vmem:[#allocation5 + $0x8] sm:$0xf]
    %v75 = vld [vmem:[#allocation5 + $0xc] sm:$0xf]
    %v76 = vld [vmem:[#allocation5 + $0x10] sm:$0xf]
    %v77 = vld [vmem:[#allocation5 + $0x14] sm:$0xf]
    %v78 = vld [vmem:[#allocation5 + $0x18] sm:$0xf]
    %v79 = vld [vmem:[#allocation5 + $0x1c] sm:$0xf]
    %v80 = vld [vmem:[#allocation5 + $0x20] sm:$0xf]
    %v81 = vld [vmem:[#allocation5 + $0x24] sm:$0xf]
    %v82 = vld [vmem:[#allocation5 + $0x28] sm:$0xf]
    %v83 = vld [vmem:[#allocation5 + $0x2c] sm:$0xf]
    %v84 = vld [vmem:[#allocation5 + $0x30] sm:$0xf]
    %v85 = vld [vmem:[#allocation5 + $0x34] sm:$0xf]
    %v86 = vld [vmem:[#allocation5 + $0x38] sm:$0xf]
    %v87 = vld [vmem:[#allocation5 + $0x3c] sm:$0xf]
    %v88 = vld [vmem:[%s2] sm:$0x1]
    %v90 = vlaneseq
    %v91 = vshrl.u32 %v90, 7
    %v92 = vsub.s32 0, %v91
    %v93 = vrot.slane %v88, %v92
    %v111 = vunpack.c.l.b16 %v72
    %v112 = vunpack.c.l.b16 %v73
    %v113 = vunpack.c.l.b16 %v74
    %v114 = vunpack.c.l.b16 %v75
    %v115 = vunpack.c.l.b16 %v76
    %v116 = vunpack.c.l.b16 %v77
    %v117 = vunpack.c.l.b16 %v78
    %v118 = vunpack.c.l.b16 %v79
    %v119 = vunpack.c.l.b16 %v80
    %v120 = vunpack.c.l.b16 %v81
    %v121 = vunpack.c.l.b16 %v82
    %v122 = vunpack.c.l.b16 %v83
    %v123 = vunpack.c.l.b16 %v84
    %v124 = vunpack.c.l.b16 %v85
    %v125 = vunpack.c.l.b16 %v86
    %v126 = vunpack.c.l.b16 %v87
    %v127 = vpack.c.b16 %v112, %v111
    %v128 = vpack.c.b16 %v114, %v113
    %v129 = vpack.c.b16 %v116, %v115
    %v130 = vpack.c.b16 %v118, %v117
    %v131 = vpack.c.b16 %v120, %v119
    %v132 = vpack.c.b16 %v122, %v121
    %v133 = vpack.c.b16 %v124, %v123
    %v134 = vpack.c.b16 %v126, %v125
    %143 = vmatprep.subr.bf16.mxu0 0
    %144 = vmatpush1.bf16.msra.mxu0 %v127
    %145 = vmatprep.subr.bf16.mxu0 0
    %146 = vmatpush1.bf16.msra.mxu0 %v128
    %147 = vmatprep.subr.bf16.mxu0 0
    %148 = vmatpush1.bf16.msra.mxu0 %v129
    %149 = vmatprep.subr.bf16.mxu0 0
    %150 = vmatpush1.bf16.msra.mxu0 %v130
    %151 = vmatprep.subr.bf16.mxu0 0
    %152 = vmatpush1.bf16.msra.mxu0 %v131
    %153 = vmatprep.subr.bf16.mxu0 0
    %154 = vmatpush1.bf16.msra.mxu0 %v132
    %155 = vmatprep.subr.bf16.mxu0 0
    %156 = vmatpush1.bf16.msra.mxu0 %v133
    %157 = vmatprep.subr.bf16.mxu0 0
    %158 = vmatpush1.bf16.msra.mxu0 %v134
    %159 = vmatprep.subr.bf16.mxu0 0
    %160 = vmatpush1.bf16.msra.mxu0 0
    %161 = vmatprep.subr.bf16.mxu0 0
    %162 = vmatpush1.bf16.msra.mxu0 0
    %163 = vmatprep.subr.bf16.mxu0 0
    %164 = vmatpush1.bf16.msra.mxu0 0
    %165 = vmatprep.subr.bf16.mxu0 0
    %166 = vmatpush1.bf16.msra.mxu0 0
    %167 = vmatprep.subr.bf16.mxu0 0
    %168 = vmatpush1.bf16.msra.mxu0 0
    %169 = vmatprep.subr.bf16.mxu0 0
    %170 = vmatpush1.bf16.msra.mxu0 0
    %171 = vmatprep.subr.bf16.mxu0 0
    %172 = vmatpush1.bf16.msra.mxu0 0
    %173 = vmatprep.subr.bf16.mxu0 0
    %174 = vmatpush1.bf16.msra.mxu0 0
    %175 = vmatprep.mubr.bf16.mxu0 0
    %176 = vmatmul.mubr.bf16.gmra.mrb[0].mxu0 %v71
    %v177 = vpop.f32.mrb[0].mxu0
    %v178 = vadd.f32 %v93, %v177
    %v179 = vpop.f32.mrb[0].mxu0
    %v180 = vpop.f32.mrb[0].mxu0
    %v181 = vadd.f32 %v93, %v180
    %v182 = vpop.f32.mrb[0].mxu0
    %183 = vdwg.mxu0
    %v184 = vmax.f32 %v178, 0.0
    %v185 = vmax.f32 %v181, 0.0
    %v186 = vpack.c.bf16 %v185, %v184
    %v187 = vld [vmem:[#allocation7] sm:$0xf]
    %v188 = vld [vmem:[#allocation7 + $0x4] sm:$0xf]
    %v189 = vld [vmem:[#allocation7 + $0x8] sm:$0xf]
    %v190 = vld [vmem:[#allocation7 + $0xc] sm:$0xf]
    %v191 = vld [vmem:[#allocation7 + $0x10] sm:$0xf]
    %v192 = vld [vmem:[#allocation7 + $0x14] sm:$0xf]
    %v193 = vld [vmem:[#allocation7 + $0x18] sm:$0xf]
    %v194 = vld [vmem:[#allocation7 + $0x1c] sm:$0xf]
    %v195 = vld [vmem:[#allocation7 + $0x20] sm:$0xf]
    %v196 = vld [vmem:[#allocation7 + $0x24] sm:$0xf]
    %v197 = vld [vmem:[#allocation7 + $0x28] sm:$0xf]
    %v198 = vld [vmem:[#allocation7 + $0x2c] sm:$0xf]
    %v199 = vld [vmem:[#allocation7 + $0x30] sm:$0xf]
    %v200 = vld [vmem:[#allocation7 + $0x34] sm:$0xf]
    %v201 = vld [vmem:[#allocation7 + $0x38] sm:$0xf]
    %v202 = vld [vmem:[#allocation7 + $0x3c] sm:$0xf]
    %v203 = vld [vmem:[%s4] sm:$0x1]
    %v205 = vlaneseq
    %v206 = vshrl.u32 %v205, 7
    %v207 = vsub.s32 0, %v206
    %v208 = vrot.slane %v203, %v207
    %v226 = vunpack.c.l.b16 %v187
    %v227 = vunpack.c.l.b16 %v188
    %v228 = vunpack.c.l.b16 %v189
    %v229 = vunpack.c.l.b16 %v190
    %v230 = vunpack.c.l.b16 %v191
    %v231 = vunpack.c.l.b16 %v192
    %v232 = vunpack.c.l.b16 %v193
    %v233 = vunpack.c.l.b16 %v194
    %v234 = vunpack.c.l.b16 %v195
    %v235 = vunpack.c.l.b16 %v196
    %v236 = vunpack.c.l.b16 %v197
    %v237 = vunpack.c.l.b16 %v198
    %v238 = vunpack.c.l.b16 %v199
    %v239 = vunpack.c.l.b16 %v200
    %v240 = vunpack.c.l.b16 %v201
    %v241 = vunpack.c.l.b16 %v202
    %v242 = vpack.c.b16 %v227, %v226
    %v243 = vpack.c.b16 %v229, %v228
    %v244 = vpack.c.b16 %v231, %v230
    %v245 = vpack.c.b16 %v233, %v232
    %v246 = vpack.c.b16 %v235, %v234
    %v247 = vpack.c.b16 %v237, %v236
    %v248 = vpack.c.b16 %v239, %v238
    %v249 = vpack.c.b16 %v241, %v240
    %258 = vmatprep.subr.bf16.mxu0 0
    %259 = vmatpush1.bf16.msra.mxu0 %v242
    %260 = vmatprep.subr.bf16.mxu0 0
    %261 = vmatpush1.bf16.msra.mxu0 %v243
    %262 = vmatprep.subr.bf16.mxu0 0
    %263 = vmatpush1.bf16.msra.mxu0 %v244
    %264 = vmatprep.subr.bf16.mxu0 0
    %265 = vmatpush1.bf16.msra.mxu0 %v245
    %266 = vmatprep.subr.bf16.mxu0 0
    %267 = vmatpush1.bf16.msra.mxu0 %v246
    %268 = vmatprep.subr.bf16.mxu0 0
    %269 = vmatpush1.bf16.msra.mxu0 %v247
    %270 = vmatprep.subr.bf16.mxu0 0
    %271 = vmatpush1.bf16.msra.mxu0 %v248
    %272 = vmatprep.subr.bf16.mxu0 0
    %273 = vmatpush1.bf16.msra.mxu0 %v249
    %274 = vmatprep.subr.bf16.mxu0 0
    %275 = vmatpush1.bf16.msra.mxu0 0
    %276 = vmatprep.subr.bf16.mxu0 0
    %277 = vmatpush1.bf16.msra.mxu0 0
    %278 = vmatprep.subr.bf16.mxu0 0
    %279 = vmatpush1.bf16.msra.mxu0 0
    %280 = vmatprep.subr.bf16.mxu0 0
    %281 = vmatpush1.bf16.msra.mxu0 0
    %282 = vmatprep.subr.bf16.mxu0 0
    %283 = vmatpush1.bf16.msra.mxu0 0
    %284 = vmatprep.subr.bf16.mxu0 0
    %285 = vmatpush1.bf16.msra.mxu0 0
    %286 = vmatprep.subr.bf16.mxu0 0
    %287 = vmatpush1.bf16.msra.mxu0 0
    %288 = vmatprep.subr.bf16.mxu0 0
    %289 = vmatpush1.bf16.msra.mxu0 0
    %290 = vmatprep.mubr.bf16.mxu0 0
    %291 = vmatmul.mubr.bf16.gmra.mrb[0].mxu0 %v186
    %v292 = vpop.f32.mrb[0].mxu0
    %v293 = vadd.f32 %v208, %v292
    %v294 = vpop.f32.mrb[0].mxu0
    %v295 = vpop.f32.mrb[0].mxu0
    %v296 = vadd.f32 %v208, %v295
    %v297 = vpop.f32.mrb[0].mxu0
    %298 = vdwg.mxu0
    %v299 = vadd.f32 %v293, %v69
    %v300 = vadd.f32 %v296, %v70
    %v301 = vld [vmem:[%s5] sm:$0x1]
    %v302 = vld [vmem:[%s6] sm:$0x1]
    %303 = vadd.xlane.f32.xlu0 %v299
    %v304 = vpop.xlane.xlu0 %303
    %305 = vadd.xlane.f32.xlu0 %v300
    %v306 = vpop.xlane.xlu0 %305
    %v307 = vmul.f32 %v304, 0.03125
    %v308 = vmul.f32 %v306, 0.03125
    %v309 = vsub.f32 %v299, %v307
    %v310 = vsub.f32 %v300, %v308
    %v311 = vlaneseq
    %v312 = vand.u32 %v311, 127
    %vm313 = vcmp.lt.s32.totalorder %v312, 32
    %v314 = vsel %vm313, 1, 0
    %v315 = vcvt.s32.f32 %v314
    %v316 = vmul.f32 %v309, %v315
    %v317 = vmul.f32 %v310, %v315
    %v318 = vmul.f32 %v316, %v316
    %v319 = vmul.f32 %v317, %v317
    %320 = vadd.xlane.f32.xlu0 %v318
    %v321 = vpop.xlane.xlu0 %320
    %322 = vadd.xlane.f32.xlu0 %v319
    %v323 = vpop.xlane.xlu0 %322
    %v324 = vmul.f32 %v321, 0.03125
    %v325 = vmul.f32 %v323, 0.03125
    %v326 = vadd.f32 %v324, 1e-05
    %v327 = vadd.f32 %v325, 1e-05
    %v328 = vrsqrt.pop %v326
    %v329 = vrsqrt.pop %v327
    %v330 = vmul.f32 %v309, %v328
    %v331 = vmul.f32 %v310, %v329
    %v333 = vlaneseq
    %v334 = vshrl.u32 %v333, 7
    %v335 = vsub.s32 0, %v334
    %v336 = vrot.slane %v301, %v335
    %v338 = vmul.f32 %v330, %v336
    %v339 = vmul.f32 %v331, %v336
    %v341 = vlaneseq
    %v342 = vshrl.u32 %v341, 7
    %v343 = vsub.s32 0, %v342
    %v344 = vrot.slane %v302, %v343
    %v346 = vadd.f32 %v338, %v344
    %v347 = vadd.f32 %v339, %v344
    %348 = vst [vmem:[#allocation8] sm:$0xff] %v346
    %349 = vst [vmem:[#allocation8 + $0x8] sm:$0xff] %v347
    // Predicated region
    $region42: #{tpu_custom_call.1} parent=1 // pred_check
      _
    $region43: #{tpu_custom_call.1} parent=1 // pred_check_branch
      %351 = sbr.rel (0) target = $region45
    $region44: #{tpu_custom_call.1} parent=1 // pred_region
      %s353 = ssub.s32 256, 256
      %354 = vsyncadd [#allocation4], %s353
      %s355 = sshll.u32 [#allocation8], 4
      %s356 = int_to_ptr.vmem [resolvable:$true] %s355
      %361 = dma.vmem_to_hbm [thread:$0]  %s356, 256, %s7, [#allocation4], 128, 128, 8
    $region45: #{tpu_custom_call.1} parent=1 // pred_fallthru
      _
    // Predicated region
    $region46: #{tpu_custom_call.1} parent=1 // pred_check
      _
    $region47: #{tpu_custom_call.1} parent=1 // pred_check_branch
      %363 = sbr.rel (0) target = $region49
    $region48: #{tpu_custom_call.1} parent=1 // pred_region
      %364 = dma.done [#allocation4], 256
    $region49: #{tpu_custom_call.1} parent=1 // pred_fallthru
      _
    %365 = vsyncpa [#allocation3], 1
    %366 = vsyncpa [#allocation6], 1
    %367 = vsyncpa [#allocation4], 1

</llo_original>
